<compile_context>
chip_gen: v6e
topology: v6e:2x2x1
jax: 0.10.0
libtpu: 0.0.40
codegen_flags: <defaults>
</compile_context>

<pallas_src>
import jax
import jax.numpy as jnp
from jax.experimental import pallas as pl
from jax.experimental.pallas import tpu as pltpu


def _time_model_kernel(
    x_ref,    # (D, TB)    input tile, batch on lanes
    w1_ref,   # (32, D)
    b1_ref,   # (32, 1)
    w2_ref,   # (16, 32)
    b2_ref,   # (16, 1)
    wh_ref,   # (2, 16)    fused [study; break] head weights
    bh_ref,   # (2, 1)     fused head biases
    out_ref,  # (2, TB)    row 0 = study, row 1 = break
):
    x = x_ref[...]

    # fc1 + relu   -> (32, TB)
    h1 = jnp.dot(w1_ref[...], x, preferred_element_type=jnp.float32) + b1_ref[...]
    h1 = jnp.maximum(h1, 0.0)

    # fc2 + relu   -> (16, TB)
    h2 = jnp.dot(w2_ref[...], h1, preferred_element_type=jnp.float32) + b2_ref[...]
    h2 = jnp.maximum(h2, 0.0)

    # fused heads  -> (2, TB)
    out_ref[...] = (
        jnp.dot(wh_ref[...], h2, preferred_element_type=jnp.float32) + bh_ref[...]
    )


def time_model_forward(x, params, *, tb_max=2048):
    """x: (B, input_dim) float32.  params in PyTorch nn.Linear layout.

    Returns (study, breakt), each (B, 1) float32.
    """
    w1, b1, w2, b2, ws, bs, wb, bb = params
    B, D = x.shape
    H1 = w1.shape[0]   # 32
    H2 = w2.shape[0]   # 16

    # Fuse the two 16->1 heads into a single 16->2 head.
    wh = jnp.concatenate([ws, wb], axis=0)                    # (2, 16)
    bh = jnp.concatenate([bs, bb], axis=0).reshape(2, 1)      # (2, 1)
    b1c = b1.reshape(H1, 1)
    b2c = b2.reshape(H2, 1)

    # Batch tile (lane axis): multiple of 128, padded batch length.
    tb = min(tb_max, pl.cdiv(B, 128) * 128)
    b_pad = pl.cdiv(B, tb) * tb

    # Transpose once in the wrapper: (B, D) -> (D, B_pad), batch lane-dense.
    x_t = jnp.zeros((D, b_pad), jnp.float32).at[:, :B].set(x.T)

    grid = (b_pad // tb,)

    def resident(shape):
        # Full-array block, constant index map -> weight stays in VMEM.
        return pl.BlockSpec(shape, lambda i: (0, 0))

    out_t = pl.pallas_call(
        _time_model_kernel,
        out_shape=jax.ShapeDtypeStruct((2, b_pad), jnp.float32),
        grid=grid,
        in_specs=[
            pl.BlockSpec((D, tb), lambda i: (0, i)),   # x tile, streamed
            resident((H1, D)),
            resident((H1, 1)),
            resident((H2, H1)),
            resident((H2, 1)),
            resident((2, H2)),
            resident((2, 1)),
        ],
        out_specs=pl.BlockSpec((2, tb), lambda i: (0, i)),
        compiler_params=pltpu.CompilerParams(
            dimension_semantics=("parallel",),
        ),
    )(x_t, w1, b1c, w2, b2c, wh, bh)

    study = out_t[0, :B].reshape(B, 1)
    breakt = out_t[1, :B].reshape(B, 1)
    return study, breakt


def init_params(key, input_dim):
    """Deterministic synthetic params in PyTorch nn.Linear layout."""
    ks = jax.random.split(key, 8)
    s = 0.1
    w1 = s * jax.random.normal(ks[0], (32, input_dim), jnp.float32)
    b1 = s * jax.random.normal(ks[1], (32,), jnp.float32)
    w2 = s * jax.random.normal(ks[2], (16, 32), jnp.float32)
    b2 = s * jax.random.normal(ks[3], (16,), jnp.float32)
    ws = s * jax.random.normal(ks[4], (1, 16), jnp.float32)
    bs = s * jax.random.normal(ks[5], (1,), jnp.float32)
    wb = s * jax.random.normal(ks[6], (1, 16), jnp.float32)
    bb = s * jax.random.normal(ks[7], (1,), jnp.float32)
    return (w1, b1, w2, b2, ws, bs, wb, bb)


def reference_forward(x, params):
    """Pure-JAX reference matching the PyTorch module."""
    w1, b1, w2, b2, ws, bs, wb, bb = params
    h1 = jnp.maximum(x @ w1.T + b1, 0.0)
    h2 = jnp.maximum(h1 @ w2.T + b2, 0.0)
    return h2 @ ws.T + bs, h2 @ wb.T + bb


if __name__ == "__main__":
    key = jax.random.PRNGKey(0)
    k_x, k_p, k_x2 = jax.random.split(key, 3)

    input_dim = 8
    params = init_params(k_p, input_dim)

    # Small shapes consistent with the module.
    batch = 4
    x = jax.random.normal(k_x, (batch, input_dim), jnp.float32)
    study, breakt = time_model_forward(x, params)
    jax.block_until_ready((study, breakt))

    study_ref, break_ref = reference_forward(x, params)
    assert study.shape == (batch, 1) and breakt.shape == (batch, 1)
    assert jnp.allclose(study, study_ref, atol=1e-5, rtol=1e-5)
    assert jnp.allclose(breakt, break_ref, atol=1e-5, rtol=1e-5)

    # Second check exercising the batch grid (multiple tiles + tail padding).
    batch2 = 1000
    x2 = jax.random.normal(k_x2, (batch2, input_dim), jnp.float32)
    study2, breakt2 = time_model_forward(x2, params, tb_max=256)
    jax.block_until_ready((study2, breakt2))
    s2_ref, b2_ref = reference_forward(x2, params)
    assert jnp.allclose(study2, s2_ref, atol=1e-5, rtol=1e-5)
    assert jnp.allclose(breakt2, b2_ref, atol=1e-5, rtol=1e-5)

    print("KERNEL_OK")
</pallas_src>

<mosaic_0001>
module attributes {stable_mosaic.version = 11 : i64} {
  func.func @_time_model_kernel(%arg0: i32, %arg1: memref<8x128xf32, #tpu.memory_space<vmem>>, %arg2: memref<32x8xf32, #tpu.memory_space<vmem>>, %arg3: memref<32x1xf32, #tpu.memory_space<vmem>>, %arg4: memref<16x32xf32, #tpu.memory_space<vmem>>, %arg5: memref<16x1xf32, #tpu.memory_space<vmem>>, %arg6: memref<2x16xf32, #tpu.memory_space<vmem>>, %arg7: memref<2x1xf32, #tpu.memory_space<vmem>>, %arg8: memref<2x128xf32, #tpu.memory_space<vmem>>) attributes {dimension_semantics = [#tpu.dimension_semantics<parallel>], iteration_bounds = array<i64: 1>, scalar_prefetch = 0 : i64, scratch_operands = 0 : i64, tpu.core_type = #tpu.core_type<tc>, window_params = [{transform_indices = @transform_0, window_bounds = array<i64: 8, 128>}, {pipeline_mode = #tpu.pipeline_mode<synchronous>, transform_indices = @transform_1, window_bounds = array<i64: 32, 8>}, {pipeline_mode = #tpu.pipeline_mode<synchronous>, transform_indices = @transform_2, window_bounds = array<i64: 32, 1>}, {pipeline_mode = #tpu.pipeline_mode<synchronous>, transform_indices = @transform_3, window_bounds = array<i64: 16, 32>}, {pipeline_mode = #tpu.pipeline_mode<synchronous>, transform_indices = @transform_4, window_bounds = array<i64: 16, 1>}, {pipeline_mode = #tpu.pipeline_mode<synchronous>, transform_indices = @transform_5, window_bounds = array<i64: 2, 16>}, {pipeline_mode = #tpu.pipeline_mode<synchronous>, transform_indices = @transform_6, window_bounds = array<i64: 2, 1>}, {transform_indices = @transform_7, window_bounds = array<i64: 2, 128>}]} {
    %c0 = arith.constant 0 : index
    %c0_0 = arith.constant 0 : index
    %0 = vector.load %arg1[%c0, %c0_0] : memref<8x128xf32, #tpu.memory_space<vmem>>, vector<8x128xf32>
    %c0_1 = arith.constant 0 : index
    %c0_2 = arith.constant 0 : index
    %1 = vector.load %arg2[%c0_1, %c0_2] : memref<32x8xf32, #tpu.memory_space<vmem>>, vector<32x8xf32>
    %cst = arith.constant dense<0.000000e+00> : vector<32x128xf32>
    %2 = tpu.matmul %1, %0, %cst {dimension_numbers = #tpu.dot_dimension_numbers<[1], [0], [0], [1], [0, 0, 1, 1], [], []>} : vector<32x8xf32>, vector<8x128xf32>, vector<32x128xf32> -> vector<32x128xf32>
    %c0_3 = arith.constant 0 : index
    %c0_4 = arith.constant 0 : index
    %3 = vector.load %arg3[%c0_3, %c0_4] : memref<32x1xf32, #tpu.memory_space<vmem>>, vector<32x1xf32>
    %4 = vector.broadcast %3 : vector<32x1xf32> to vector<32x128xf32>
    %5 = arith.addf %2, %4 : vector<32x128xf32>
    %cst_5 = arith.constant 0.000000e+00 : f32
    %6 = vector.broadcast %cst_5 : f32 to vector<32x128xf32>
    %7 = arith.maximumf %5, %6 : vector<32x128xf32>
    %c0_6 = arith.constant 0 : index
    %c0_7 = arith.constant 0 : index
    %8 = vector.load %arg4[%c0_6, %c0_7] : memref<16x32xf32, #tpu.memory_space<vmem>>, vector<16x32xf32>
    %cst_8 = arith.constant dense<0.000000e+00> : vector<16x128xf32>
    %9 = tpu.matmul %8, %7, %cst_8 {dimension_numbers = #tpu.dot_dimension_numbers<[1], [0], [0], [1], [0, 0, 1, 1], [], []>} : vector<16x32xf32>, vector<32x128xf32>, vector<16x128xf32> -> vector<16x128xf32>
    %c0_9 = arith.constant 0 : index
    %c0_10 = arith.constant 0 : index
    %10 = vector.load %arg5[%c0_9, %c0_10] : memref<16x1xf32, #tpu.memory_space<vmem>>, vector<16x1xf32>
    %11 = vector.broadcast %10 : vector<16x1xf32> to vector<16x128xf32>
    %12 = arith.addf %9, %11 : vector<16x128xf32>
    %cst_11 = arith.constant 0.000000e+00 : f32
    %13 = vector.broadcast %cst_11 : f32 to vector<16x128xf32>
    %14 = arith.maximumf %12, %13 : vector<16x128xf32>
    %c0_12 = arith.constant 0 : index
    %c0_13 = arith.constant 0 : index
    %15 = vector.load %arg6[%c0_12, %c0_13] : memref<2x16xf32, #tpu.memory_space<vmem>>, vector<2x16xf32>
    %cst_14 = arith.constant dense<0.000000e+00> : vector<2x128xf32>
    %16 = tpu.matmul %15, %14, %cst_14 {dimension_numbers = #tpu.dot_dimension_numbers<[1], [0], [0], [1], [0, 0, 1, 1], [], []>} : vector<2x16xf32>, vector<16x128xf32>, vector<2x128xf32> -> vector<2x128xf32>
    %c0_15 = arith.constant 0 : index
    %c0_16 = arith.constant 0 : index
    %17 = vector.load %arg7[%c0_15, %c0_16] : memref<2x1xf32, #tpu.memory_space<vmem>>, vector<2x1xf32>
    %18 = vector.broadcast %17 : vector<2x1xf32> to vector<2x128xf32>
    %19 = arith.addf %16, %18 : vector<2x128xf32>
    %c0_17 = arith.constant 0 : index
    %c0_18 = arith.constant 0 : index
    %20 = vector.load %arg8[%c0_17, %c0_18] : memref<2x128xf32, #tpu.memory_space<vmem>>, vector<2x128xf32>
    tpu.vector_store %arg8[%c0_17, %c0_18], %19 {strides = array<i32>} : memref<2x128xf32, #tpu.memory_space<vmem>>, vector<2x128xf32>,
    return
  }
  func.func @transform_0(%arg0: i32) -> (i32, i32) {
    %c0_i32 = arith.constant 0 : i32
    %c0_i32_0 = arith.constant 0 : i32
    return %c0_i32, %arg0 : i32, i32
  }
  func.func @transform_1(%arg0: i32) -> (i32, i32) {
    %c0_i32 = arith.constant 0 : i32
    %c0_i32_0 = arith.constant 0 : i32
    %c0_i32_1 = arith.constant 0 : i32
    return %c0_i32, %c0_i32_0 : i32, i32
  }
  func.func @transform_2(%arg0: i32) -> (i32, i32) {
    %c0_i32 = arith.constant 0 : i32
    %c0_i32_0 = arith.constant 0 : i32
    %c0_i32_1 = arith.constant 0 : i32
    return %c0_i32, %c0_i32_0 : i32, i32
  }
  func.func @transform_3(%arg0: i32) -> (i32, i32) {
    %c0_i32 = arith.constant 0 : i32
    %c0_i32_0 = arith.constant 0 : i32
    %c0_i32_1 = arith.constant 0 : i32
    return %c0_i32, %c0_i32_0 : i32, i32
  }
  func.func @transform_4(%arg0: i32) -> (i32, i32) {
    %c0_i32 = arith.constant 0 : i32
    %c0_i32_0 = arith.constant 0 : i32
    %c0_i32_1 = arith.constant 0 : i32
    return %c0_i32, %c0_i32_0 : i32, i32
  }
  func.func @transform_5(%arg0: i32) -> (i32, i32) {
    %c0_i32 = arith.constant 0 : i32
    %c0_i32_0 = arith.constant 0 : i32
    %c0_i32_1 = arith.constant 0 : i32
    return %c0_i32, %c0_i32_0 : i32, i32
  }
  func.func @transform_6(%arg0: i32) -> (i32, i32) {
    %c0_i32 = arith.constant 0 : i32
    %c0_i32_0 = arith.constant 0 : i32
    %c0_i32_1 = arith.constant 0 : i32
    return %c0_i32, %c0_i32_0 : i32, i32
  }
  func.func @transform_7(%arg0: i32) -> (i32, i32) {
    %c0_i32 = arith.constant 0 : i32
    %c0_i32_0 = arith.constant 0 : i32
    return %c0_i32, %arg0 : i32, i32
  }
}

</mosaic_0001>

<llo_original>
// kernel: tpu_custom_call.1
$region0: #{tpu_custom_call.1}
  #allocation0 [shape = 'u32[]', space=smem, size = 0x4, offset = 0x4, fixed_abs, tag = 'smem constant byte address 0x4 - core index']
  #allocation1 [shape = 'u32[144,128]{1,0:T(1,128)}', space=vmem, size = 0x12000, scoped, tag = 'internal scratch']
  %s0 = inlined_call_operand.vmem [shape: f32[8,128], index: 0, kind: input, shape index: {}]
  %s1 = inlined_call_operand.vmem [shape: f32[32,8], index: 1, kind: input, shape index: {}]
  %s2 = inlined_call_operand.vmem [shape: f32[32,1], index: 2, kind: input, shape index: {}]
  %s3 = inlined_call_operand.vmem [shape: f32[16,32], index: 3, kind: input, shape index: {}]
  %s4 = inlined_call_operand.vmem [shape: f32[16,1], index: 4, kind: input, shape index: {}]
  %s5 = inlined_call_operand.vmem [shape: f32[2,16], index: 5, kind: input, shape index: {}]
  %s6 = inlined_call_operand.vmem [shape: f32[2,1], index: 6, kind: input, shape index: {}]
  %s7 = inlined_call_operand.hbm [shape: f32[2,128], index: 7, kind: output, shape index: {}]
  %s8 = sld [smem:[#allocation0]]
  $region38: #{tpu_custom_call.1} parent=0
    _
  %s10 = ssub.s32 1, %s8
  %s11 = scalar_select 0, %s10, %s8
  $region1: #{tpu_custom_call.1} parent=0
    #allocation2 [shape = 'u8[1024]{0}', space=vmem, size = 0x400, scoped, tag = 'output window, operand 0, single buffered']
    #allocation3 [shape = 's32[1]{0}', space=sflag, size = 0x4, scoped, tag = 'scoped memory for tpu_custom_call.1']
    %12 = vsyncpa [#allocation3], 0
    // Predicated region
    $region2: #{tpu_custom_call.1} parent=1 // pred_check
      _
    $region3: #{tpu_custom_call.1} parent=1 // pred_check_branch
      %14 = sbr.rel (0) target = $region5
    $region4: #{tpu_custom_call.1} parent=1 // pred_region
      _
    $region5: #{tpu_custom_call.1} parent=1 // pred_fallthru
      _
    // Predicated region
    $region6: #{tpu_custom_call.1} parent=1 // pred_check
      _
    $region7: #{tpu_custom_call.1} parent=1 // pred_check_branch
      %16 = sbr.rel (0) target = $region9
    $region8: #{tpu_custom_call.1} parent=1 // pred_region
      _
    $region9: #{tpu_custom_call.1} parent=1 // pred_fallthru
      _
    // Predicated region
    $region10: #{tpu_custom_call.1} parent=1 // pred_check
      _
    $region11: #{tpu_custom_call.1} parent=1 // pred_check_branch
      %18 = sbr.rel (0) target = $region13
    $region12: #{tpu_custom_call.1} parent=1 // pred_region
      _
    $region13: #{tpu_custom_call.1} parent=1 // pred_fallthru
      _
    // Predicated region
    $region14: #{tpu_custom_call.1} parent=1 // pred_check
      _
    $region15: #{tpu_custom_call.1} parent=1 // pred_check_branch
      %20 = sbr.rel (0) target = $region17
    $region16: #{tpu_custom_call.1} parent=1 // pred_region
      _
    $region17: #{tpu_custom_call.1} parent=1 // pred_fallthru
      _
    // Predicated region
    $region18: #{tpu_custom_call.1} parent=1 // pred_check
      _
    $region19: #{tpu_custom_call.1} parent=1 // pred_check_branch
      %22 = sbr.rel (0) target = $region21
    $region20: #{tpu_custom_call.1} parent=1 // pred_region
      _
    $region21: #{tpu_custom_call.1} parent=1 // pred_fallthru
      _
    // Predicated region
    $region22: #{tpu_custom_call.1} parent=1 // pred_check
      _
    $region23: #{tpu_custom_call.1} parent=1 // pred_check_branch
      %24 = sbr.rel (0) target = $region25
    $region24: #{tpu_custom_call.1} parent=1 // pred_region
      _
    $region25: #{tpu_custom_call.1} parent=1 // pred_fallthru
      _
    // Predicated region
    $region26: #{tpu_custom_call.1} parent=1 // pred_check
      _
    $region27: #{tpu_custom_call.1} parent=1 // pred_check_branch
      %26 = sbr.rel (0) target = $region29
    $region28: #{tpu_custom_call.1} parent=1 // pred_region
      _
    $region29: #{tpu_custom_call.1} parent=1 // pred_fallthru
      _
    %v27 = vld [vmem:[%s0] sm:$0xff]
    %v28 = vld [vmem:[%s1] sm:$0xff]
    %v29 = vld [vmem:[%s1 + $0x8] sm:$0xff]
    %v30 = vld [vmem:[%s1 + $0x10] sm:$0xff]
    %v31 = vld [vmem:[%s1 + $0x18] sm:$0xff]
    %v32 = vld [vmem:[%s2] sm:$0xff]
    %v33 = vld [vmem:[%s2 + $0x8] sm:$0xff]
    %v34 = vld [vmem:[%s2 + $0x10] sm:$0xff]
    %v35 = vld [vmem:[%s2 + $0x18] sm:$0xff]
    %37 = vset.pattern.permute.xlu0 0
    %38 = vperm.xlu0 %37, %v32
    %v39 = vpop.permute.xlu0 %38
    %42 = vset.pattern.permute.xlu0 0
    %43 = vperm.xlu0 %42, %v33
    %v44 = vpop.permute.xlu0 %43
    %47 = vset.pattern.permute.xlu0 0
    %48 = vperm.xlu0 %47, %v34
    %v49 = vpop.permute.xlu0 %48
    %52 = vset.pattern.permute.xlu0 0
    %53 = vperm.xlu0 %52, %v35
    %v54 = vpop.permute.xlu0 %53
    %vm56 = vcmask 64512
    %v58 = vsel %vm56, %v28, 0
    %v61 = vsel %vm56, %v29, 0
    %v64 = vsel %vm56, %v30, 0
    %v67 = vsel %vm56, %v31, 0
    %69 = vmatprep.subr.mxu0 0.0
    %70 = vmatpush1.msra.mxu0 0.0
    %71 = vmatprep.subr.mxu0 0.0
    %72 = vmatpush1.msra.mxu0 0.0
    %73 = vmatprep.subr.mxu0 0.0
    %74 = vmatpush1.msra.mxu0 0.0
    %75 = vmatprep.subr.mxu0 0.0
    %76 = vmatpush1.msra.mxu0 0.0
    %77 = vmatprep.subr.mxu0 0.0
    %78 = vmatpush1.msra.mxu0 0.0
    %79 = vmatprep.subr.mxu0 0.0
    %80 = vmatpush1.msra.mxu0 0.0
    %81 = vmatprep.subr.mxu0 0.0
    %82 = vmatpush1.msra.mxu0 0.0
    %83 = vmatprep.subr.mxu0 0.0
    %84 = vmatpush1.msra.mxu0 0.0
    %85 = vmatprep.subr.mxu0 0.0
    %86 = vmatpush1.msra.mxu0 0.0
    %87 = vmatprep.subr.mxu0 0.0
    %88 = vmatpush1.msra.mxu0 0.0
    %89 = vmatprep.subr.mxu0 0.0
    %90 = vmatpush1.msra.mxu0 0.0
    %91 = vmatprep.subr.mxu0 0.0
    %92 = vmatpush1.msra.mxu0 0.0
    %93 = vmatprep.subr.mxu0 0.0
    %94 = vmatpush1.msra.mxu0 0.0
    %95 = vmatprep.subr.mxu0 0.0
    %96 = vmatpush1.msra.mxu0 0.0
    %97 = vmatprep.subr.mxu0 0.0
    %98 = vmatpush1.msra.mxu0 0.0
    %99 = vmatprep.subr.mxu0 0.0
    %100 = vmatpush1.msra.mxu0 %v27
    %101 = vmatprep.subr.mxu0 0.0
    %102 = vmatpush2.msra.mxu0 0.0
    %103 = vmatprep.subr.mxu0 0.0
    %104 = vmatpush2.msra.mxu0 0.0
    %105 = vmatprep.subr.mxu0 0.0
    %106 = vmatpush2.msra.mxu0 0.0
    %107 = vmatprep.subr.mxu0 0.0
    %108 = vmatpush2.msra.mxu0 0.0
    %109 = vmatprep.subr.mxu0 0.0
    %110 = vmatpush2.msra.mxu0 0.0
    %111 = vmatprep.subr.mxu0 0.0
    %112 = vmatpush2.msra.mxu0 0.0
    %113 = vmatprep.subr.mxu0 0.0
    %114 = vmatpush2.msra.mxu0 0.0
    %115 = vmatprep.subr.mxu0 0.0
    %116 = vmatpush2.msra.mxu0 0.0
    %117 = vmatprep.subr.mxu0 0.0
    %118 = vmatpush2.msra.mxu0 0.0
    %119 = vmatprep.subr.mxu0 0.0
    %120 = vmatpush2.msra.mxu0 0.0
    %121 = vmatprep.subr.mxu0 0.0
    %122 = vmatpush2.msra.mxu0 0.0
    %123 = vmatprep.subr.mxu0 0.0
    %124 = vmatpush2.msra.mxu0 0.0
    %125 = vmatprep.subr.mxu0 0.0
    %126 = vmatpush2.msra.mxu0 0.0
    %127 = vmatprep.subr.mxu0 0.0
    %128 = vmatpush2.msra.mxu0 0.0
    %129 = vmatprep.subr.mxu0 0.0
    %130 = vmatpush2.msra.mxu0 0.0
    %131 = vmatprep.subr.mxu0 0.0
    %132 = vmatpush2.msra.mxu0 0.0
    %133 = vmatprep.mubr.f32.mxu0 0.0
    %134 = vmatmul.mubr.f32.gmra.mxu0 %v58
    %v135 = vpop.f32.mrf.mxu0
    %v136 = vadd.f32 %v39, %v135
    %v137 = vpop.f32.mrf.mxu0
    %138 = vmatprep.mubr.f32.mxu0 0.0
    %139 = vmatmul.mubr.f32.gmra.mxu0 %v61
    %v140 = vpop.f32.mrf.mxu0
    %v141 = vadd.f32 %v44, %v140
    %v142 = vpop.f32.mrf.mxu0
    %143 = vmatprep.mubr.f32.mxu0 0.0
    %144 = vmatmul.mubr.f32.gmra.mxu0 %v64
    %v145 = vpop.f32.mrf.mxu0
    %v146 = vadd.f32 %v49, %v145
    %v147 = vpop.f32.mrf.mxu0
    %148 = vmatprep.mubr.f32.mxu0 0.0
    %149 = vmatmul.mubr.f32.gmra.mxu0 %v67
    %v150 = vpop.f32.mrf.mxu0
    %v151 = vadd.f32 %v54, %v150
    %v152 = vpop.f32.mrf.mxu0
    %153 = vdwg.mxu0
    %v154 = vmax.f32 %v136, 0.0
    %v155 = vmax.f32 %v141, 0.0
    %v156 = vmax.f32 %v146, 0.0
    %v157 = vmax.f32 %v151, 0.0
    %v158 = vld [vmem:[%s3] sm:$0xff]
    %v159 = vld [vmem:[%s3 + $0x8] sm:$0xff]
    %v160 = vld [vmem:[%s4] sm:$0xff]
    %v161 = vld [vmem:[%s4 + $0x8] sm:$0xff]
    %163 = vset.pattern.permute.xlu0 0
    %164 = vperm.xlu0 %163, %v160
    %v165 = vpop.permute.xlu0 %164
    %168 = vset.pattern.permute.xlu0 0
    %169 = vperm.xlu0 %168, %v161
    %v170 = vpop.permute.xlu0 %169
    %vm172 = vcmask 261120
    %v174 = vsel %vm172, %v158, 0
    %v177 = vsel %vm172, %v159, 0
    %179 = vmatprep.subr.mxu0 0.0
    %180 = vmatpush1.msra.mxu0 0.0
    %181 = vmatprep.subr.mxu0 0.0
    %182 = vmatpush1.msra.mxu0 0.0
    %183 = vmatprep.subr.mxu0 0.0
    %184 = vmatpush1.msra.mxu0 0.0
    %185 = vmatprep.subr.mxu0 0.0
    %186 = vmatpush1.msra.mxu0 0.0
    %187 = vmatprep.subr.mxu0 0.0
    %188 = vmatpush1.msra.mxu0 0.0
    %189 = vmatprep.subr.mxu0 0.0
    %190 = vmatpush1.msra.mxu0 0.0
    %191 = vmatprep.subr.mxu0 0.0
    %192 = vmatpush1.msra.mxu0 0.0
    %193 = vmatprep.subr.mxu0 0.0
    %194 = vmatpush1.msra.mxu0 0.0
    %195 = vmatprep.subr.mxu0 0.0
    %196 = vmatpush1.msra.mxu0 0.0
    %197 = vmatprep.subr.mxu0 0.0
    %198 = vmatpush1.msra.mxu0 0.0
    %199 = vmatprep.subr.mxu0 0.0
    %200 = vmatpush1.msra.mxu0 0.0
    %201 = vmatprep.subr.mxu0 0.0
    %202 = vmatpush1.msra.mxu0 0.0
    %203 = vmatprep.subr.mxu0 0.0
    %204 = vmatpush1.msra.mxu0 %v157
    %205 = vmatprep.subr.mxu0 0.0
    %206 = vmatpush1.msra.mxu0 %v156
    %207 = vmatprep.subr.mxu0 0.0
    %208 = vmatpush1.msra.mxu0 %v155
    %209 = vmatprep.subr.mxu0 0.0
    %210 = vmatpush1.msra.mxu0 %v154
    %211 = vmatprep.subr.mxu0 0.0
    %212 = vmatpush2.msra.mxu0 0.0
    %213 = vmatprep.subr.mxu0 0.0
    %214 = vmatpush2.msra.mxu0 0.0
    %215 = vmatprep.subr.mxu0 0.0
    %216 = vmatpush2.msra.mxu0 0.0
    %217 = vmatprep.subr.mxu0 0.0
    %218 = vmatpush2.msra.mxu0 0.0
    %219 = vmatprep.subr.mxu0 0.0
    %220 = vmatpush2.msra.mxu0 0.0
    %221 = vmatprep.subr.mxu0 0.0
    %222 = vmatpush2.msra.mxu0 0.0
    %223 = vmatprep.subr.mxu0 0.0
    %224 = vmatpush2.msra.mxu0 0.0
    %225 = vmatprep.subr.mxu0 0.0
    %226 = vmatpush2.msra.mxu0 0.0
    %227 = vmatprep.subr.mxu0 0.0
    %228 = vmatpush2.msra.mxu0 0.0
    %229 = vmatprep.subr.mxu0 0.0
    %230 = vmatpush2.msra.mxu0 0.0
    %231 = vmatprep.subr.mxu0 0.0
    %232 = vmatpush2.msra.mxu0 0.0
    %233 = vmatprep.subr.mxu0 0.0
    %234 = vmatpush2.msra.mxu0 0.0
    %235 = vmatprep.subr.mxu0 0.0
    %236 = vmatpush2.msra.mxu0 0.0
    %237 = vmatprep.subr.mxu0 0.0
    %238 = vmatpush2.msra.mxu0 0.0
    %239 = vmatprep.subr.mxu0 0.0
    %240 = vmatpush2.msra.mxu0 0.0
    %241 = vmatprep.subr.mxu0 0.0
    %242 = vmatpush2.msra.mxu0 0.0
    %243 = vmatprep.mubr.f32.mxu0 0.0
    %244 = vmatmul.mubr.f32.gmra.mxu0 %v174
    %v245 = vpop.f32.mrf.mxu0
    %v246 = vadd.f32 %v165, %v245
    %v247 = vpop.f32.mrf.mxu0
    %248 = vmatprep.mubr.f32.mxu0 0.0
    %249 = vmatmul.mubr.f32.gmra.mxu0 %v177
    %v250 = vpop.f32.mrf.mxu0
    %v251 = vadd.f32 %v170, %v250
    %v252 = vpop.f32.mrf.mxu0
    %253 = vdwg.mxu0
    %v254 = vmax.f32 %v246, 0.0
    %v255 = vmax.f32 %v251, 0.0
    %v256 = vld [vmem:[%s5] sm:$0x3]
    %v257 = vld [vmem:[%s6] sm:$0x3]
    %259 = vset.pattern.permute.xlu0 0
    %260 = vperm.xlu0 %259, %v257
    %v261 = vpop.permute.xlu0 %260
    %vm263 = vcmask 130048
    %v265 = vsel %vm263, %v256, 0
    %267 = vmatprep.subr.mxu0 0.0
    %268 = vmatpush1.msra.mxu0 0.0
    %269 = vmatprep.subr.mxu0 0.0
    %270 = vmatpush1.msra.mxu0 0.0
    %271 = vmatprep.subr.mxu0 0.0
    %272 = vmatpush1.msra.mxu0 0.0
    %273 = vmatprep.subr.mxu0 0.0
    %274 = vmatpush1.msra.mxu0 0.0
    %275 = vmatprep.subr.mxu0 0.0
    %276 = vmatpush1.msra.mxu0 0.0
    %277 = vmatprep.subr.mxu0 0.0
    %278 = vmatpush1.msra.mxu0 0.0
    %279 = vmatprep.subr.mxu0 0.0
    %280 = vmatpush1.msra.mxu0 0.0
    %281 = vmatprep.subr.mxu0 0.0
    %282 = vmatpush1.msra.mxu0 0.0
    %283 = vmatprep.subr.mxu0 0.0
    %284 = vmatpush1.msra.mxu0 0.0
    %285 = vmatprep.subr.mxu0 0.0
    %286 = vmatpush1.msra.mxu0 0.0
    %287 = vmatprep.subr.mxu0 0.0
    %288 = vmatpush1.msra.mxu0 0.0
    %289 = vmatprep.subr.mxu0 0.0
    %290 = vmatpush1.msra.mxu0 0.0
    %291 = vmatprep.subr.mxu0 0.0
    %292 = vmatpush1.msra.mxu0 0.0
    %293 = vmatprep.subr.mxu0 0.0
    %294 = vmatpush1.msra.mxu0 0.0
    %295 = vmatprep.subr.mxu0 0.0
    %296 = vmatpush1.msra.mxu0 %v255
    %297 = vmatprep.subr.mxu0 0.0
    %298 = vmatpush1.msra.mxu0 %v254
    %299 = vmatprep.subr.mxu0 0.0
    %300 = vmatpush2.msra.mxu0 0.0
    %301 = vmatprep.subr.mxu0 0.0
    %302 = vmatpush2.msra.mxu0 0.0
    %303 = vmatprep.subr.mxu0 0.0
    %304 = vmatpush2.msra.mxu0 0.0
    %305 = vmatprep.subr.mxu0 0.0
    %306 = vmatpush2.msra.mxu0 0.0
    %307 = vmatprep.subr.mxu0 0.0
    %308 = vmatpush2.msra.mxu0 0.0
    %309 = vmatprep.subr.mxu0 0.0
    %310 = vmatpush2.msra.mxu0 0.0
    %311 = vmatprep.subr.mxu0 0.0
    %312 = vmatpush2.msra.mxu0 0.0
    %313 = vmatprep.subr.mxu0 0.0
    %314 = vmatpush2.msra.mxu0 0.0
    %315 = vmatprep.subr.mxu0 0.0
    %316 = vmatpush2.msra.mxu0 0.0
    %317 = vmatprep.subr.mxu0 0.0
    %318 = vmatpush2.msra.mxu0 0.0
    %319 = vmatprep.subr.mxu0 0.0
    %320 = vmatpush2.msra.mxu0 0.0
    %321 = vmatprep.subr.mxu0 0.0
    %322 = vmatpush2.msra.mxu0 0.0
    %323 = vmatprep.subr.mxu0 0.0
    %324 = vmatpush2.msra.mxu0 0.0
    %325 = vmatprep.subr.mxu0 0.0
    %326 = vmatpush2.msra.mxu0 0.0
    %327 = vmatprep.subr.mxu0 0.0
    %328 = vmatpush2.msra.mxu0 0.0
    %329 = vmatprep.subr.mxu0 0.0
    %330 = vmatpush2.msra.mxu0 0.0
    %331 = vmatprep.mubr.f32.mxu0 0.0
    %332 = vmatmul.mubr.f32.gmra.mxu0 %v265
    %v333 = vpop.f32.mrf.mxu0
    %v334 = vadd.f32 %v261, %v333
    %v335 = vpop.f32.mrf.mxu0
    %336 = vdwg.mxu0
    %337 = vst [vmem:[#allocation2] sm:$0x3] %v334
    // Predicated region
    $region30: #{tpu_custom_call.1} parent=1 // pred_check
      _
    $region31: #{tpu_custom_call.1} parent=1 // pred_check_branch
      %339 = sbr.rel (0) target = $region33
    $region32: #{tpu_custom_call.1} parent=1 // pred_region
      %s341 = ssub.s32 32, 32
      %342 = vsyncadd [#allocation3], %s341
      %s344 = sshll.u32 [#allocation2], 4
      %s345 = int_to_ptr.vmem [resolvable:$true] %s344
      %347 = dma.vmem_to_hbm [thread:$0]  %s345, 32, %s7, [#allocation3]
    $region33: #{tpu_custom_call.1} parent=1 // pred_fallthru
      _
    // Predicated region
    $region34: #{tpu_custom_call.1} parent=1 // pred_check
      _
    $region35: #{tpu_custom_call.1} parent=1 // pred_check_branch
      %349 = sbr.rel (0) target = $region37
    $region36: #{tpu_custom_call.1} parent=1 // pred_region
      %350 = dma.done [#allocation3], 32
    $region37: #{tpu_custom_call.1} parent=1 // pred_fallthru
      _
    %351 = vsyncpa [#allocation3], 1

</llo_original>
